<compile_context>
chip_gen: v7x
topology: tpu7x:2x2x1
jax: 0.10.0
libtpu: 0.0.40
codegen_flags: <defaults>
</compile_context>

<pallas_src>
import math

import jax
import jax.numpy as jnp
from jax.experimental import pallas as pl
from jax.experimental.pallas import tpu as pltpu


def _round_up(x, m):
    return ((x + m - 1) // m) * m


def fourier_features(x, weight):
    """FourierFeatures forward pass.

    x:      (..., in_features)
    weight: (out_features // 2, in_features)  (PyTorch param layout)
    returns (..., out_features) in x.dtype, = cat([cos(f), sin(f)], -1),
            f = 2*pi * x @ weight.T
    """
    orig_dtype = x.dtype
    *lead, K = x.shape
    H, Kw = weight.shape
    assert Kw == K, (Kw, K)
    out_features = 2 * H

    N = 1
    for d in lead:
        N *= d

    # Empty batch: nothing to compute.
    if N == 0:
        return jnp.zeros((*lead, out_features), dtype=orig_dtype)

    x2 = x.reshape(N, K)  # reshape only; dtype cast happens in-kernel.

    # Host-side (tiny) weight prep: fold in 2*pi, duplicate for the cos|sin
    # halves, and build the phase row implementing cos(f) = sin(f + pi/2).
    wt = (2.0 * math.pi) * weight.astype(jnp.float32).T          # (K, H)
    wt2 = jnp.concatenate([wt, wt], axis=1)                      # (K, 2H)
    phase = jnp.concatenate(
        [jnp.full((1, H), 0.5 * math.pi, dtype=jnp.float32),
         jnp.zeros((1, H), dtype=jnp.float32)], axis=1)          # (1, 2H)

    # --- batch tile selection -------------------------------------------------
    # Big tiles for a bandwidth-bound kernel, but keep the double-buffered
    # output block comfortably inside the default scoped VMEM.
    itemsize = jnp.dtype(orig_dtype).itemsize
    out_row_bytes = max(out_features * itemsize, 1)
    vmem_budget = 12 * 1024 * 1024                                # per output buffer
    tm_vmem = max(8, (vmem_budget // out_row_bytes) // 8 * 8)
    TM = max(8, min(1024, tm_vmem, _round_up(N, 8)))
    grid_steps = pl.cdiv(N, TM)

    def kernel(x_ref, w_ref, p_ref, out_ref):
        # x_ref: (TM, K)   w_ref: (K, 2H)   p_ref: (1, 2H)   out_ref: (TM, 2H)
        xs = x_ref[...].astype(jnp.float32)
        if K <= 8:
            # Tiny contraction (timestep embeddings): exact f32 VPU
            # outer-product accumulation; a K-deep matmul would waste the MXU.
            f = xs[:, 0:1] * w_ref[0:1, :]
            for k in range(1, K):
                f = f + xs[:, k:k + 1] * w_ref[k:k + 1, :]
        else:
            f = jnp.dot(xs, w_ref[...], preferred_element_type=jnp.float32)
        f = f + p_ref[...]                       # broadcast phase row
        # Single transcendental + single contiguous store, cast at the store.
        # (Polynomial kept in f32 so range reduction stays accurate; a
        # per-chip bf16 polynomial on v6e/v7x is a possible further micro-opt.)
        out_ref[...] = jnp.sin(f).astype(out_ref.dtype)

    out = pl.pallas_call(
        kernel,
        out_shape=jax.ShapeDtypeStruct((N, out_features), orig_dtype),
        grid_spec=pltpu.PrefetchScalarGridSpec(
            num_scalar_prefetch=0,
            grid=(grid_steps,),
            in_specs=[
                pl.BlockSpec((TM, K), lambda i: (i, 0)),               # x tile
                pl.BlockSpec((K, out_features), lambda i: (0, 0)),     # weights (resident)
                pl.BlockSpec((1, out_features), lambda i: (0, 0)),     # phase   (resident)
            ],
            out_specs=pl.BlockSpec((TM, out_features), lambda i: (i, 0)),
        ),
        compiler_params=pltpu.CompilerParams(
            dimension_semantics=("parallel",)),
    )(x2, wt2, phase)

    return out.reshape(*lead, out_features)


def reference(x, weight):
    f = 2.0 * math.pi * (x.astype(jnp.float32) @ weight.astype(jnp.float32).T)
    return jnp.concatenate([jnp.cos(f), jnp.sin(f)], axis=-1).astype(x.dtype)


if __name__ == "__main__":
    key = jax.random.PRNGKey(0)
    kx, kw = jax.random.split(key)

    # Small shapes consistent with the module: batch=8 timesteps embedded with
    # in_features=4, out_features=32 (so weight is (16, 4)).
    N, in_features, out_features = 8, 4, 32
    std = 1.0

    x = jax.random.normal(kx, (N, in_features), dtype=jnp.float32)
    weight = std * jax.random.normal(
        kw, (out_features // 2, in_features), dtype=jnp.float32)

    out = jax.block_until_ready(fourier_features(x, weight))
    ref = jax.block_until_ready(reference(x, weight))

    assert out.shape == (N, out_features), out.shape
    assert out.dtype == x.dtype, out.dtype
    assert jnp.allclose(out, ref, rtol=1e-5, atol=1e-5), float(
        jnp.max(jnp.abs(out - ref)))

    print("KERNEL_OK")
</pallas_src>

<mosaic_0001>
module attributes {stable_mosaic.version = 11 : i64} {
  func.func @kernel(%arg0: i32, %arg1: memref<8x4xf32, #tpu.memory_space<vmem>>, %arg2: memref<4x32xf32, #tpu.memory_space<vmem>>, %arg3: memref<1x32xf32, #tpu.memory_space<vmem>>, %arg4: memref<8x32xf32, #tpu.memory_space<vmem>>) attributes {dimension_semantics = [#tpu.dimension_semantics<parallel>], iteration_bounds = array<i64: 1>, scalar_prefetch = 0 : i64, scratch_operands = 0 : i64, tpu.core_type = #tpu.core_type<tc>, window_params = [{transform_indices = @transform_0, window_bounds = array<i64: 8, 4>}, {pipeline_mode = #tpu.pipeline_mode<synchronous>, transform_indices = @transform_1, window_bounds = array<i64: 4, 32>}, {pipeline_mode = #tpu.pipeline_mode<synchronous>, transform_indices = @transform_2, window_bounds = array<i64: 1, 32>}, {transform_indices = @transform_3, window_bounds = array<i64: 8, 32>}]} {
    %c0 = arith.constant 0 : index
    %c0_0 = arith.constant 0 : index
    %0 = vector.load %arg1[%c0, %c0_0] : memref<8x4xf32, #tpu.memory_space<vmem>>, vector<8x4xf32>
    %1 = vector.extract_strided_slice %0 {offsets = [0, 0], sizes = [8, 1], strides = [1, 1]} : vector<8x4xf32> to vector<8x1xf32>
    %c0_1 = arith.constant 0 : index
    %c0_2 = arith.constant 0 : index
    %2 = vector.load %arg2[%c0_1, %c0_2] : memref<4x32xf32, #tpu.memory_space<vmem>>, vector<1x32xf32>
    %3 = vector.broadcast %1 : vector<8x1xf32> to vector<8x32xf32>
    %4 = vector.broadcast %2 : vector<1x32xf32> to vector<8x32xf32>
    %5 = arith.mulf %3, %4 : vector<8x32xf32>
    %6 = vector.extract_strided_slice %0 {offsets = [0, 1], sizes = [8, 1], strides = [1, 1]} : vector<8x4xf32> to vector<8x1xf32>
    %c1 = arith.constant 1 : index
    %c0_3 = arith.constant 0 : index
    %7 = vector.load %arg2[%c1, %c0_3] : memref<4x32xf32, #tpu.memory_space<vmem>>, vector<1x32xf32>
    %8 = vector.broadcast %6 : vector<8x1xf32> to vector<8x32xf32>
    %9 = vector.broadcast %7 : vector<1x32xf32> to vector<8x32xf32>
    %10 = arith.mulf %8, %9 : vector<8x32xf32>
    %11 = arith.addf %5, %10 : vector<8x32xf32>
    %12 = vector.extract_strided_slice %0 {offsets = [0, 2], sizes = [8, 1], strides = [1, 1]} : vector<8x4xf32> to vector<8x1xf32>
    %c2 = arith.constant 2 : index
    %c0_4 = arith.constant 0 : index
    %13 = vector.load %arg2[%c2, %c0_4] : memref<4x32xf32, #tpu.memory_space<vmem>>, vector<1x32xf32>
    %14 = vector.broadcast %12 : vector<8x1xf32> to vector<8x32xf32>
    %15 = vector.broadcast %13 : vector<1x32xf32> to vector<8x32xf32>
    %16 = arith.mulf %14, %15 : vector<8x32xf32>
    %17 = arith.addf %11, %16 : vector<8x32xf32>
    %18 = vector.extract_strided_slice %0 {offsets = [0, 3], sizes = [8, 1], strides = [1, 1]} : vector<8x4xf32> to vector<8x1xf32>
    %c3 = arith.constant 3 : index
    %c0_5 = arith.constant 0 : index
    %19 = vector.load %arg2[%c3, %c0_5] : memref<4x32xf32, #tpu.memory_space<vmem>>, vector<1x32xf32>
    %20 = vector.broadcast %18 : vector<8x1xf32> to vector<8x32xf32>
    %21 = vector.broadcast %19 : vector<1x32xf32> to vector<8x32xf32>
    %22 = arith.mulf %20, %21 : vector<8x32xf32>
    %23 = arith.addf %17, %22 : vector<8x32xf32>
    %c0_6 = arith.constant 0 : index
    %c0_7 = arith.constant 0 : index
    %24 = vector.load %arg3[%c0_6, %c0_7] : memref<1x32xf32, #tpu.memory_space<vmem>>, vector<1x32xf32>
    %25 = vector.broadcast %24 : vector<1x32xf32> to vector<8x32xf32>
    %26 = arith.addf %23, %25 : vector<8x32xf32>
    %27 = math.sin %26 : vector<8x32xf32>
    %c0_8 = arith.constant 0 : index
    %c0_9 = arith.constant 0 : index
    %28 = vector.load %arg4[%c0_8, %c0_9] : memref<8x32xf32, #tpu.memory_space<vmem>>, vector<8x32xf32>
    tpu.vector_store %arg4[%c0_8, %c0_9], %27 {strides = array<i32>} : memref<8x32xf32, #tpu.memory_space<vmem>>, vector<8x32xf32>,
    return
  }
  func.func @transform_0(%arg0: i32) -> (i32, i32) {
    %c0_i32 = arith.constant 0 : i32
    %c0_i32_0 = arith.constant 0 : i32
    return %arg0, %c0_i32 : i32, i32
  }
  func.func @transform_1(%arg0: i32) -> (i32, i32) {
    %c0_i32 = arith.constant 0 : i32
    %c0_i32_0 = arith.constant 0 : i32
    %c0_i32_1 = arith.constant 0 : i32
    return %c0_i32, %c0_i32_0 : i32, i32
  }
  func.func @transform_2(%arg0: i32) -> (i32, i32) {
    %c0_i32 = arith.constant 0 : i32
    %c0_i32_0 = arith.constant 0 : i32
    %c0_i32_1 = arith.constant 0 : i32
    return %c0_i32, %c0_i32_0 : i32, i32
  }
  func.func @transform_3(%arg0: i32) -> (i32, i32) {
    %c0_i32 = arith.constant 0 : i32
    %c0_i32_0 = arith.constant 0 : i32
    return %arg0, %c0_i32 : i32, i32
  }
}

</mosaic_0001>

<llo_original>
// kernel: tpu_custom_call.1
$region0: #{tpu_custom_call.1}
  #allocation0 [shape = 'u32[]', space=smem, size = 0x4, offset = 0x4, fixed_abs, tag = 'smem constant byte address 0x4 - core index']
  #allocation1 [shape = 'u32[144,128]{1,0:T(1,128)}', space=vmem, size = 0x12000, scoped, tag = 'internal scratch']
  %s0 = inlined_call_operand.vmem [shape: f32[8,4], index: 0, kind: input, shape index: {}]
  %s1 = inlined_call_operand.vmem [shape: f32[4,32], index: 1, kind: input, shape index: {}]
  %s2 = inlined_call_operand.vmem [shape: f32[1,32], index: 2, kind: input, shape index: {}]
  %s3 = inlined_call_operand.hbm [shape: f32[8,32], index: 3, kind: output, shape index: {}]
  %s4 = sld [smem:[#allocation0]]
  $region22: #{tpu_custom_call.1} parent=0
    _
  %s6 = ssub.s32 1, %s4
  %s7 = scalar_select 0, %s6, %s4
  $region1: #{tpu_custom_call.1} parent=0
    #allocation2 [shape = 'u8[4096]{0}', space=vmem, size = 0x1000, scoped, tag = 'output window, operand 0, single buffered']
    #allocation3 [shape = 's32[1]{0}', space=sflag, size = 0x4, scoped, tag = 'scoped memory for tpu_custom_call.1']
    %8 = vsyncpa [#allocation3], 0
    // Predicated region
    $region2: #{tpu_custom_call.1} parent=1 // pred_check
      _
    $region3: #{tpu_custom_call.1} parent=1 // pred_check_branch
      %10 = sbr.rel (0) target = $region5
    $region4: #{tpu_custom_call.1} parent=1 // pred_region
      _
    $region5: #{tpu_custom_call.1} parent=1 // pred_fallthru
      _
    // Predicated region
    $region6: #{tpu_custom_call.1} parent=1 // pred_check
      _
    $region7: #{tpu_custom_call.1} parent=1 // pred_check_branch
      %12 = sbr.rel (0) target = $region9
    $region8: #{tpu_custom_call.1} parent=1 // pred_region
      _
    $region9: #{tpu_custom_call.1} parent=1 // pred_fallthru
      _
    // Predicated region
    $region10: #{tpu_custom_call.1} parent=1 // pred_check
      _
    $region11: #{tpu_custom_call.1} parent=1 // pred_check_branch
      %14 = sbr.rel (0) target = $region13
    $region12: #{tpu_custom_call.1} parent=1 // pred_region
      _
    $region13: #{tpu_custom_call.1} parent=1 // pred_fallthru
      _
    %v15 = vld [vmem:[%s0] sm:$0xff]
    %v16 = vld [vmem:[%s1] sm:$0x1]
    %18 = vset.pattern.permute.xlu0 0
    %19 = vperm.xlu0 %18, %v15
    %v20 = vpop.permute.xlu0 %19
    %v22 = vlaneseq
    %v23 = vshrl.u32 %v22, 7
    %v24 = vsub.s32 0, %v23
    %v25 = vrot.slane %v16, %v24
    %v26 = vmul.f32 %v20, %v25
    %v27 = vld [vmem:[%s1 + $0x1] sm:$0x1]
    %28 = vset.pattern.permute.xlu0 1
    %29 = vperm.xlu0 %28, %v15
    %v30 = vpop.permute.xlu0 %29
    %v32 = vlaneseq
    %v33 = vshrl.u32 %v32, 7
    %v34 = vsub.s32 0, %v33
    %v35 = vrot.slane %v27, %v34
    %v36 = vmul.f32 %v30, %v35
    %v37 = vadd.f32 %v26, %v36
    %v38 = vld [vmem:[%s1 + $0x2] sm:$0x1]
    %39 = vset.pattern.permute.xlu0 2
    %40 = vperm.xlu0 %39, %v15
    %v41 = vpop.permute.xlu0 %40
    %v43 = vlaneseq
    %v44 = vshrl.u32 %v43, 7
    %v45 = vsub.s32 0, %v44
    %v46 = vrot.slane %v38, %v45
    %v47 = vmul.f32 %v41, %v46
    %v48 = vadd.f32 %v37, %v47
    %v49 = vld [vmem:[%s1 + $0x3] sm:$0x1]
    %50 = vset.pattern.permute.xlu0 3
    %51 = vperm.xlu0 %50, %v15
    %v52 = vpop.permute.xlu0 %51
    %v54 = vlaneseq
    %v55 = vshrl.u32 %v54, 7
    %v56 = vsub.s32 0, %v55
    %v57 = vrot.slane %v49, %v56
    %v58 = vmul.f32 %v52, %v57
    %v59 = vadd.f32 %v48, %v58
    %v60 = vld [vmem:[%s2] sm:$0x1]
    %v62 = vlaneseq
    %v63 = vshrl.u32 %v62, 7
    %v64 = vsub.s32 0, %v63
    %v65 = vrot.slane %v60, %v64
    %v67 = vadd.f32 %v59, %v65
    %v68 = vand.u32 2147483647, %v67
    %vm69 = vcmp.le.f32.partialorder %v68, 0.7853982
    %vm70 = vcmp.lt.s32.totalorder %v67, 0
    %v71 = vand.u32 %v67, 2139095040
    %v72 = vshrl.u32 %v71, 23
    %v73 = vsub.s32 %v72, 127
    %v74 = vand.u32 2147483647, %v67
    %v75 = vand.u32 %v74, 8388607
    %v76 = vor.u32 %v75, 8388608
    %v77 = vsub.s32 0, %v76
    %v78 = vadd.s32 %v73, 1
    %vm79 = vcmp.gt.s32.totalorder %v78, 0
    %v80 = vsel %vm79, %v78, 0
    %v81 = vshrl.u32 %v80, 5
    %v82 = vand.u32 %v80, 31
    %v83 = vsub.s32 32, %v82
    %v84 = vshrl.u32 683565275, %v83
    %v85 = vshll.u32 683565275, %v82
    %v86 = vshrl.u32 2475754826, %v83
    %v87 = vor.u32 %v85, %v86
    %v88 = vshll.u32 2475754826, %v82
    %v89 = vshrl.u32 2131351028, %v83
    %v90 = vor.u32 %v88, %v89
    %v91 = vshll.u32 2131351028, %v82
    %v92 = vshrl.u32 2102212464, %v83
    %v93 = vor.u32 %v91, %v92
    %v94 = vshll.u32 2102212464, %v82
    %v95 = vshrl.u32 920167782, %v83
    %v96 = vor.u32 %v94, %v95
    %v97 = vshll.u32 920167782, %v82
    %v98 = vshrl.u32 1326507024, %v83
    %v99 = vor.u32 %v97, %v98
    %vm100 = vcmp.lt.s32.totalorder %v81, 1
    %vm101 = vcmp.lt.s32.totalorder %v81, 2
    %vm102 = vcmp.lt.s32.totalorder %v81, 3
    %vm103 = vcmp.lt.s32.totalorder %v81, 4
    %v104 = vsel %vm100, %v84, %v87
    %v105 = vsel %vm103, %v93, 2102212464
    %v106 = vsel %vm102, %v90, %v105
    %v107 = vsel %vm101, %v104, %v106
    %v108 = vsel %vm100, %v87, %v90
    %v109 = vsel %vm103, %v96, 920167782
    %v110 = vsel %vm102, %v93, %v109
    %v111 = vsel %vm101, %v108, %v110
    %v112 = vsel %vm100, %v90, %v93
    %v113 = vsel %vm103, %v99, 1326507024
    %v114 = vsel %vm102, %v96, %v113
    %v115 = vsel %vm101, %v112, %v114
    %v116 = vshll.u32 %v76, 8
    %v117 = vmul.u32.u64.compose %v116, %v115
    %v118 = vextract.low.u32 %v117
    %v119 = vextract.high.u32 %v117
    %v120 = vmul.u32.u64.compose %v116, %v111
    %v121 = vextract.low.u32 %v120
    %v122 = vextract.high.u32 %v120
    %v123 = vmul.u32 %v116, %v107
    %v124 = vadd.s32 %v119, %v121
    %vm125 = vc.u32 %v119, %v121
    %v126 = vadd.s32 %v122, 1
    %v127 = vsel %vm125, %v126, %v122
    %v128 = vadd.s32 %v123, %v127
    %v129 = vadd.s32 %v128, 536870912
    %v130 = vshrl.u32 %v129, 30
    %v131 = vshll.u32 %v130, 30
    %v132 = vsub.s32 %v128, %v131
    %vm133 = vcmp.lt.s32.totalorder %v132, 0
    %v134 = vsub.s32 0, %v132
    %v135 = vsel %vm133, %v134, %v132
    %v136 = vclz %v135
    %v137 = vsub.s32 %v136, 2
    %vm138 = vcmp.gt.s32.totalorder 0, %v137
    %v139 = vsel %vm138, 0, %v137
    %v140 = vsub.s32 32, %v139
    %v141 = vshll.u32 %v132, %v139
    %v142 = vshrl.u32 %v124, %v140
    %v143 = vor.u32 %v141, %v142
    %v144 = vsub.s32 4294967266, %v139
    %v145 = vadd.s32 %v144, 127
    %v146 = vshll.u32 %v145, 23
    %v147 = vor.u32 4788187, %v146
    %v148 = vand.u32 2147483647, %v147
    %v150 = vcvt.s32.f32 %v143
    %v151 = vmul.f32 %v150, %v148
    %v152 = vxor.u32 %v151, 2147483648
    %v153 = vsel %vm70, %v152, %v151
    %v154 = vsub.s32 4, %v130
    %v155 = vsel %vm70, %v154, %v130
    %v156 = vsel %vm69, %v67, %v153
    %v157 = vsel %vm69, 0, %v155
    %v158 = vcosq.f32.pop %v156
    %v159 = vsinq.f32.pop %v156
    %vm160 = vweird.f32 %v67
    %v161 = vadd.s32 %v157, 3
    %v162 = vand.u32 %v161, 3
    %vm163 = vcmp.lt.s32.totalorder %v162, 2
    %vm164 = vcmp.eq.s32.totalorder %v162, 0
    %v165 = vxor.u32 %v159, 2147483648
    %v166 = vsel %vm164, %v158, %v165
    %vm167 = vcmp.eq.s32.totalorder %v162, 2
    %v168 = vxor.u32 %v158, 2147483648
    %v169 = vsel %vm167, %v168, %v159
    %v170 = vsel %vm163, %v166, %v169
    %v171 = vsel %vm160, nan, %v170
    %vm172 = vcmask 261120
    %173 = vst.msk [vmem:[#allocation2] sm:$0xff] %vm172, %v171
    // Predicated region
    $region14: #{tpu_custom_call.1} parent=1 // pred_check
      _
    $region15: #{tpu_custom_call.1} parent=1 // pred_check_branch
      %175 = sbr.rel (0) target = $region17
    $region16: #{tpu_custom_call.1} parent=1 // pred_region
      %s177 = ssub.s32 128, 128
      %178 = vsyncadd [#allocation3], %s177
      %s180 = sshll.u32 [#allocation2], 4
      %s181 = int_to_ptr.vmem [resolvable:$true] %s180
      %183 = dma.vmem_to_hbm [thread:$0]  %s181, 128, %s3, [#allocation3]
    $region17: #{tpu_custom_call.1} parent=1 // pred_fallthru
      _
    // Predicated region
    $region18: #{tpu_custom_call.1} parent=1 // pred_check
      _
    $region19: #{tpu_custom_call.1} parent=1 // pred_check_branch
      %185 = sbr.rel (0) target = $region21
    $region20: #{tpu_custom_call.1} parent=1 // pred_region
      %186 = dma.done [#allocation3], 128
    $region21: #{tpu_custom_call.1} parent=1 // pred_fallthru
      _
    %187 = vsyncpa [#allocation3], 1

</llo_original>
